<compile_context>
chip_gen: v5e
topology: v5e:2x2
jax: 0.10.0
libtpu: 0.0.40
codegen_flags: <defaults>
</compile_context>

<pallas_src>
import jax
import jax.numpy as jnp
import numpy as np
from jax.experimental import pallas as pl
from jax.experimental.pallas import tpu as pltpu


def _round_up(x, m):
    return ((x + m - 1) // m) * m


def _masked_clf_kernel_single(x_ref, m_ref, w_ref, b_ref, o_ref):
    """Whole problem resident in VMEM: one VPU mask-mul + one MXU matmul."""
    # mask multiply in f32 (safe on v5e), cast to the stream dtype for the MXU
    y = (x_ref[...].astype(jnp.float32) * m_ref[...]).astype(w_ref.dtype)
    o_ref[...] = (
        jnp.dot(y, w_ref[...], preferred_element_type=jnp.float32)
        + b_ref[...]
    ).astype(o_ref.dtype)


def _masked_clf_kernel_tiled(x_ref, m_ref, w_ref, b_ref, o_ref):
    """grid = (N_tiles [parallel], D_tiles [arbitrary/reduction]).

    The f32 output block is resident across the reduction axis and serves as
    the accumulator directly (no separate VMEM scratch).
    """
    k = pl.program_id(1)

    @pl.when(k == 0)
    def _():
        o_ref[...] = jnp.zeros_like(o_ref)

    y = (x_ref[...].astype(jnp.float32) * m_ref[...]).astype(w_ref.dtype)
    o_ref[...] += jnp.dot(y, w_ref[...], preferred_element_type=jnp.float32)

    @pl.when(k == pl.num_programs(1) - 1)
    def _():
        o_ref[...] += b_ref[...]


def masked_clf(x_nchw, mask_param, w, b, *, tk=512, tn=128,
               stream_dtype=None,
               single_block_max_bytes=32 * 1024 * 1024):
    """x_nchw: [B,C,H,W] f32; mask_param: [1,C,H,W]; w: [D,N]; b: [N].

    stream_dtype: optional narrower dtype (e.g. jnp.bfloat16) for the two
    streamed operands x and w. Accumulation is always f32.
    """
    B, C, H, W = x_nchw.shape
    D = C * H * W
    N = w.shape[1]

    Bp = max(8, _round_up(B, 8))        # sublane-aligned batch rows
    Np = max(128, _round_up(N, 128))    # lane-dense classes / weight columns

    x2d = x_nchw.reshape(B, D).astype(jnp.float32)
    m2d = mask_param.reshape(1, D).astype(jnp.float32)
    w2d = w.astype(jnp.float32)
    b2d = b.reshape(1, N).astype(jnp.float32)

    if Bp != B:
        x2d = jnp.pad(x2d, ((0, Bp - B), (0, 0)))
    if Np != N:
        w2d = jnp.pad(w2d, ((0, 0), (0, Np - N)))
        b2d = jnp.pad(b2d, ((0, 0), (0, Np - N)))

    if stream_dtype is not None:
        x2d = x2d.astype(stream_dtype)
        w2d = w2d.astype(stream_dtype)

    itemsize = jnp.dtype(stream_dtype or jnp.float32).itemsize
    vmem_bytes = (Bp * D * itemsize      # x
                  + D * 4                # mask (f32)
                  + D * Np * itemsize    # w
                  + Np * 4               # bias (f32)
                  + Bp * Np * 4)         # output (f32)

    if vmem_bytes <= single_block_max_bytes:
        # ------- single-block path: no reduction grid, no scratch -------
        out = pl.pallas_call(
            _masked_clf_kernel_single,
            out_shape=jax.ShapeDtypeStruct((Bp, Np), jnp.float32),
            grid_spec=pltpu.PrefetchScalarGridSpec(
                num_scalar_prefetch=0,
                grid=(1,),
                in_specs=[
                    pl.BlockSpec((Bp, D), lambda i: (0, 0)),   # x (full)
                    pl.BlockSpec((1, D), lambda i: (0, 0)),    # mask (full)
                    pl.BlockSpec((D, Np), lambda i: (0, 0)),   # weight (full)
                    pl.BlockSpec((1, Np), lambda i: (0, 0)),   # bias (full)
                ],
                out_specs=pl.BlockSpec((Bp, Np), lambda i: (0, 0)),
            ),
            compiler_params=pltpu.CompilerParams(
                dimension_semantics=("arbitrary",)),
        )(x2d, m2d, w2d, b2d)
        return out[:B, :N]

    # ------- K-tiled reduction path for large D -------
    assert tk % 128 == 0, "tk must be a multiple of 128"
    tn = min(tn, Np)
    assert tn % 128 == 0 and Np % tn == 0, "tn must be 128-aligned and divide Np"

    Dp = _round_up(D, tk)
    if Dp != D:
        # zero-pad the reduction axis: padded x rows * zero mask * zero w rows
        # contribute nothing, so semantics are unchanged.
        x2d = jnp.pad(x2d, ((0, 0), (0, Dp - D)))
        m2d = jnp.pad(m2d, ((0, 0), (0, Dp - D)))
        w2d = jnp.pad(w2d, ((0, Dp - D), (0, 0)))

    grid = (Np // tn, Dp // tk)
    out = pl.pallas_call(
        _masked_clf_kernel_tiled,
        out_shape=jax.ShapeDtypeStruct((Bp, Np), jnp.float32),
        grid_spec=pltpu.PrefetchScalarGridSpec(
            num_scalar_prefetch=0,
            grid=grid,
            in_specs=[
                pl.BlockSpec((Bp, tk), lambda j, k: (0, k)),   # x tile
                pl.BlockSpec((1, tk), lambda j, k: (0, k)),    # mask tile
                pl.BlockSpec((tk, tn), lambda j, k: (k, j)),   # weight tile
                pl.BlockSpec((1, tn), lambda j, k: (0, j)),    # bias tile
            ],
            out_specs=pl.BlockSpec((Bp, tn), lambda j, k: (0, j)),
        ),
        compiler_params=pltpu.CompilerParams(
            dimension_semantics=("parallel", "arbitrary")),
    )(x2d, m2d, w2d, b2d)
    return out[:B, :N]


if __name__ == "__main__":
    # Small shapes consistent with the module's forward: NCHW conv-style input.
    B, C, H, W = 2, 4, 16, 16
    D = C * H * W          # 1024
    N_CLASSES = 10

    key = jax.random.PRNGKey(0)
    kx, km, kw, kb = jax.random.split(key, 4)

    x = jax.random.normal(kx, (B, C, H, W), dtype=jnp.float32)
    # Deterministic parameter init (synthetic, no checkpoint load).
    mask_param = jax.random.uniform(km, (1, C, H, W), dtype=jnp.float32)
    w = jax.random.normal(kw, (D, N_CLASSES), dtype=jnp.float32) * 0.02
    b = jax.random.normal(kb, (N_CLASSES,), dtype=jnp.float32) * 0.02

    # Pure-JAX reference for semantics check: clf(mask(x))
    ref = (x * mask_param).reshape(B, D) @ w + b

    # 1) single-block path (whole problem resident in VMEM), f32.
    out1 = jax.block_until_ready(masked_clf(x, mask_param, w, b))
    assert out1.shape == (B, N_CLASSES)
    assert np.allclose(np.asarray(out1), np.asarray(ref), rtol=1e-5, atol=1e-5)

    # 2) K-tiled reduction path (what a large production D would take), f32.
    out2 = jax.block_until_ready(
        masked_clf(x, mask_param, w, b, tk=256, single_block_max_bytes=0))
    assert np.allclose(np.asarray(out2), np.asarray(ref), rtol=1e-5, atol=1e-5)

    # 3) bf16 streaming of x / w (halved HBM traffic), f32 accumulation.
    out3 = jax.block_until_ready(
        masked_clf(x, mask_param, w, b, stream_dtype=jnp.bfloat16))
    assert np.allclose(np.asarray(out3), np.asarray(ref), rtol=5e-2, atol=5e-2)

    print("KERNEL_OK")
</pallas_src>

<mosaic_0001>
module attributes {stable_mosaic.version = 11 : i64} {
  func.func @_masked_clf_kernel_single(%arg0: i32, %arg1: memref<8x1024xf32, #tpu.memory_space<vmem>>, %arg2: memref<1x1024xf32, #tpu.memory_space<vmem>>, %arg3: memref<1024x128xf32, #tpu.memory_space<vmem>>, %arg4: memref<1x128xf32, #tpu.memory_space<vmem>>, %arg5: memref<8x128xf32, #tpu.memory_space<vmem>>) attributes {dimension_semantics = [#tpu.dimension_semantics<arbitrary>], iteration_bounds = array<i64: 1>, scalar_prefetch = 0 : i64, scratch_operands = 0 : i64, tpu.core_type = #tpu.core_type<tc>, window_params = [{pipeline_mode = #tpu.pipeline_mode<synchronous>, transform_indices = @transform_0, window_bounds = array<i64: 8, 1024>}, {pipeline_mode = #tpu.pipeline_mode<synchronous>, transform_indices = @transform_1, window_bounds = array<i64: 1, 1024>}, {pipeline_mode = #tpu.pipeline_mode<synchronous>, transform_indices = @transform_2, window_bounds = array<i64: 1024, 128>}, {pipeline_mode = #tpu.pipeline_mode<synchronous>, transform_indices = @transform_3, window_bounds = array<i64: 1, 128>}, {pipeline_mode = #tpu.pipeline_mode<synchronous>, transform_indices = @transform_4, window_bounds = array<i64: 8, 128>}]} {
    %c0 = arith.constant 0 : index
    %c0_0 = arith.constant 0 : index
    %0 = vector.load %arg1[%c0, %c0_0] : memref<8x1024xf32, #tpu.memory_space<vmem>>, vector<8x1024xf32>
    %c0_1 = arith.constant 0 : index
    %c0_2 = arith.constant 0 : index
    %1 = vector.load %arg2[%c0_1, %c0_2] : memref<1x1024xf32, #tpu.memory_space<vmem>>, vector<1x1024xf32>
    %2 = vector.broadcast %1 : vector<1x1024xf32> to vector<8x1024xf32>
    %3 = arith.mulf %0, %2 : vector<8x1024xf32>
    %c0_3 = arith.constant 0 : index
    %c0_4 = arith.constant 0 : index
    %4 = vector.load %arg3[%c0_3, %c0_4] : memref<1024x128xf32, #tpu.memory_space<vmem>>, vector<1024x128xf32>
    %cst = arith.constant dense<0.000000e+00> : vector<8x128xf32>
    %5 = tpu.matmul %3, %4, %cst {dimension_numbers = #tpu.dot_dimension_numbers<[1], [0], [0], [1], [0, 0, 1, 1], [], []>} : vector<8x1024xf32>, vector<1024x128xf32>, vector<8x128xf32> -> vector<8x128xf32>
    %c0_5 = arith.constant 0 : index
    %c0_6 = arith.constant 0 : index
    %6 = vector.load %arg4[%c0_5, %c0_6] : memref<1x128xf32, #tpu.memory_space<vmem>>, vector<1x128xf32>
    %7 = vector.broadcast %6 : vector<1x128xf32> to vector<8x128xf32>
    %8 = arith.addf %5, %7 : vector<8x128xf32>
    %c0_7 = arith.constant 0 : index
    %c0_8 = arith.constant 0 : index
    %9 = vector.load %arg5[%c0_7, %c0_8] : memref<8x128xf32, #tpu.memory_space<vmem>>, vector<8x128xf32>
    tpu.vector_store %arg5[%c0_7, %c0_8], %8 {strides = array<i32>} : memref<8x128xf32, #tpu.memory_space<vmem>>, vector<8x128xf32>,
    return
  }
  func.func @transform_0(%arg0: i32) -> (i32, i32) {
    %c0_i32 = arith.constant 0 : i32
    %c0_i32_0 = arith.constant 0 : i32
    %c0_i32_1 = arith.constant 0 : i32
    return %c0_i32, %c0_i32_0 : i32, i32
  }
  func.func @transform_1(%arg0: i32) -> (i32, i32) {
    %c0_i32 = arith.constant 0 : i32
    %c0_i32_0 = arith.constant 0 : i32
    %c0_i32_1 = arith.constant 0 : i32
    return %c0_i32, %c0_i32_0 : i32, i32
  }
  func.func @transform_2(%arg0: i32) -> (i32, i32) {
    %c0_i32 = arith.constant 0 : i32
    %c0_i32_0 = arith.constant 0 : i32
    %c0_i32_1 = arith.constant 0 : i32
    return %c0_i32, %c0_i32_0 : i32, i32
  }
  func.func @transform_3(%arg0: i32) -> (i32, i32) {
    %c0_i32 = arith.constant 0 : i32
    %c0_i32_0 = arith.constant 0 : i32
    %c0_i32_1 = arith.constant 0 : i32
    return %c0_i32, %c0_i32_0 : i32, i32
  }
  func.func @transform_4(%arg0: i32) -> (i32, i32) {
    %c0_i32 = arith.constant 0 : i32
    %c0_i32_0 = arith.constant 0 : i32
    %c0_i32_1 = arith.constant 0 : i32
    return %c0_i32, %c0_i32_0 : i32, i32
  }
}

</mosaic_0001>

<llo_original>
// kernel: tpu_custom_call.1
$region0: #{tpu_custom_call.1}
  #allocation0 [shape = 'u32[]', space=smem, size = 0x4, offset = 0x4, fixed_abs, tag = 'smem constant byte address 0x4 - core index']
  #allocation1 [shape = 'u32[72,128]{1,0:T(1,128)}', space=vmem, size = 0x9000, scoped, tag = 'internal scratch']
  %s0 = inlined_call_operand.hbm [shape: f32[8,1024], index: 0, kind: input, shape index: {}]
  %s1 = inlined_call_operand.hbm [shape: f32[1,1024], index: 1, kind: input, shape index: {}]
  %s2 = inlined_call_operand.hbm [shape: f32[1024,128], index: 2, kind: input, shape index: {}]
  %s3 = inlined_call_operand.vmem [shape: f32[1,128], index: 3, kind: input, shape index: {}]
  %s4 = inlined_call_operand.hbm [shape: f32[8,128], index: 4, kind: output, shape index: {}]
  %s5 = sld [smem:[#allocation0]]
  $region38: #{tpu_custom_call.1} parent=0
    _
  %s7 = ssub.s32 1, %s5
  %s8 = scalar_select 0, %s7, %s5
  $region1: #{tpu_custom_call.1} parent=0
    #allocation2 [shape = 'u8[32768]{0}', space=vmem, size = 0x8000, scoped, tag = 'input window, operand 0, single buffered']
    #allocation3 [shape = 's32[1]{0}', space=sflag, size = 0x4, scoped, tag = 'scoped memory for tpu_custom_call.1']
    #allocation4 [shape = 's32[1]{0}', space=sflag, size = 0x4, scoped, tag = 'scoped memory for tpu_custom_call.1']
    #allocation5 [shape = 'u8[4096]{0}', space=vmem, size = 0x1000, scoped, tag = 'input window, operand 1, single buffered']
    #allocation6 [shape = 's32[1]{0}', space=sflag, size = 0x4, scoped, tag = 'scoped memory for tpu_custom_call.1']
    #allocation7 [shape = 'u8[524288]{0}', space=vmem, size = 0x80000, scoped, tag = 'input window, operand 2, single buffered']
    #allocation8 [shape = 'u8[4096]{0}', space=vmem, size = 0x1000, scoped, tag = 'output window, operand 0, single buffered']
    %9 = vsyncpa [#allocation3], 0
    %10 = vsyncpa [#allocation6], 0
    %11 = vsyncpa [#allocation4], 0
    // Predicated region
    $region2: #{tpu_custom_call.1} parent=1 // pred_check
      _
    $region3: #{tpu_custom_call.1} parent=1 // pred_check_branch
      %13 = sbr.rel (0) target = $region5
    $region4: #{tpu_custom_call.1} parent=1 // pred_region
      %15 = vsyncadd [#allocation3], 0
      %s17 = sshll.u32 %s0, 4
      %s18 = int_to_ptr.hbm [resolvable:$true] %s17
      %s19 = sshll.u32 [#allocation2], 4
      %s20 = int_to_ptr.vmem [resolvable:$true] %s19
      %22 = dma.hbm_to_vmem [thread:$0]  %s18, 1024, %s20, [#allocation3]
    $region5: #{tpu_custom_call.1} parent=1 // pred_fallthru
      _
    // Predicated region
    $region6: #{tpu_custom_call.1} parent=1 // pred_check
      _
    $region7: #{tpu_custom_call.1} parent=1 // pred_check_branch
      %24 = sbr.rel (0) target = $region9
    $region8: #{tpu_custom_call.1} parent=1 // pred_region
      %26 = vsyncadd [#allocation6], 0
      %s28 = sshll.u32 %s1, 4
      %s29 = int_to_ptr.hbm [resolvable:$true] %s28
      %s30 = sshll.u32 [#allocation5], 4
      %s31 = int_to_ptr.vmem [resolvable:$true] %s30
      %33 = dma.hbm_to_vmem [thread:$0]  %s29, 128, %s31, [#allocation6]
    $region9: #{tpu_custom_call.1} parent=1 // pred_fallthru
      _
    // Predicated region
    $region10: #{tpu_custom_call.1} parent=1 // pred_check
      _
    $region11: #{tpu_custom_call.1} parent=1 // pred_check_branch
      %35 = sbr.rel (0) target = $region13
    $region12: #{tpu_custom_call.1} parent=1 // pred_region
      %37 = vsyncadd [#allocation6], 0
      %s38 = sshll.u32 %s2, 4
      %s39 = int_to_ptr.hbm [resolvable:$true] %s38
      %s40 = sshll.u32 [#allocation7], 4
      %s41 = int_to_ptr.vmem [resolvable:$true] %s40
      %46 = dma.hbm_to_vmem [thread:$0]  %s39, 16384, %s41, [#allocation6], 128, 128, 8
    $region13: #{tpu_custom_call.1} parent=1 // pred_fallthru
      _
    // Predicated region
    $region14: #{tpu_custom_call.1} parent=1 // pred_check
      _
    $region15: #{tpu_custom_call.1} parent=1 // pred_check_branch
      %48 = sbr.rel (0) target = $region17
    $region16: #{tpu_custom_call.1} parent=1 // pred_region
      _
    $region17: #{tpu_custom_call.1} parent=1 // pred_fallthru
      _
    // Predicated region
    $region18: #{tpu_custom_call.1} parent=1 // pred_check
      _
    $region19: #{tpu_custom_call.1} parent=1 // pred_check_branch
      %50 = sbr.rel (0) target = $region21
    $region20: #{tpu_custom_call.1} parent=1 // pred_region
      %52 = dma.done [#allocation3], 1024
    $region21: #{tpu_custom_call.1} parent=1 // pred_fallthru
      _
    // Predicated region
    $region22: #{tpu_custom_call.1} parent=1 // pred_check
      _
    $region23: #{tpu_custom_call.1} parent=1 // pred_check_branch
      %54 = sbr.rel (0) target = $region25
    $region24: #{tpu_custom_call.1} parent=1 // pred_region
      %56 = dma.done [#allocation6], 128
    $region25: #{tpu_custom_call.1} parent=1 // pred_fallthru
      _
    // Predicated region
    $region26: #{tpu_custom_call.1} parent=1 // pred_check
      _
    $region27: #{tpu_custom_call.1} parent=1 // pred_check_branch
      %58 = sbr.rel (0) target = $region29
    $region28: #{tpu_custom_call.1} parent=1 // pred_region
      %60 = dma.done [#allocation6], 16384
    $region29: #{tpu_custom_call.1} parent=1 // pred_fallthru
      _
    %v61 = vld [vmem:[#allocation2] sm:$0xff]
    %v62 = vld [vmem:[#allocation2 + $0x8] sm:$0xff]
    %v63 = vld [vmem:[#allocation2 + $0x10] sm:$0xff]
    %v64 = vld [vmem:[#allocation2 + $0x18] sm:$0xff]
    %v65 = vld [vmem:[#allocation2 + $0x20] sm:$0xff]
    %v66 = vld [vmem:[#allocation2 + $0x28] sm:$0xff]
    %v67 = vld [vmem:[#allocation2 + $0x30] sm:$0xff]
    %v68 = vld [vmem:[#allocation2 + $0x38] sm:$0xff]
    %v69 = vld [vmem:[#allocation5] sm:$0xff]
    %v71 = vperm.slane %v69, 0
    %v72 = vperm.slane %v69, 1
    %v73 = vperm.slane %v69, 2
    %v74 = vperm.slane %v69, 3
    %v75 = vperm.slane %v69, 4
    %v76 = vperm.slane %v69, 5
    %v77 = vperm.slane %v69, 6
    %v78 = vperm.slane %v69, 7
    %v87 = vmul.f32 %v61, %v71
    %v88 = vmul.f32 %v62, %v72
    %v89 = vmul.f32 %v63, %v73
    %v90 = vmul.f32 %v64, %v74
    %v91 = vmul.f32 %v65, %v75
    %v92 = vmul.f32 %v66, %v76
    %v93 = vmul.f32 %v67, %v77
    %v94 = vmul.f32 %v68, %v78
    %v95 = vld [vmem:[#allocation7] sm:$0xff]
    %v96 = vld [vmem:[#allocation7 + $0x8] sm:$0xff]
    %v97 = vld [vmem:[#allocation7 + $0x10] sm:$0xff]
    %v98 = vld [vmem:[#allocation7 + $0x18] sm:$0xff]
    %v99 = vld [vmem:[#allocation7 + $0x20] sm:$0xff]
    %v100 = vld [vmem:[#allocation7 + $0x28] sm:$0xff]
    %v101 = vld [vmem:[#allocation7 + $0x30] sm:$0xff]
    %v102 = vld [vmem:[#allocation7 + $0x38] sm:$0xff]
    %v103 = vld [vmem:[#allocation7 + $0x40] sm:$0xff]
    %v104 = vld [vmem:[#allocation7 + $0x48] sm:$0xff]
    %v105 = vld [vmem:[#allocation7 + $0x50] sm:$0xff]
    %v106 = vld [vmem:[#allocation7 + $0x58] sm:$0xff]
    %v107 = vld [vmem:[#allocation7 + $0x60] sm:$0xff]
    %v108 = vld [vmem:[#allocation7 + $0x68] sm:$0xff]
    %v109 = vld [vmem:[#allocation7 + $0x70] sm:$0xff]
    %v110 = vld [vmem:[#allocation7 + $0x78] sm:$0xff]
    %v111 = vld [vmem:[#allocation7 + $0x80] sm:$0xff]
    %v112 = vld [vmem:[#allocation7 + $0x88] sm:$0xff]
    %v113 = vld [vmem:[#allocation7 + $0x90] sm:$0xff]
    %v114 = vld [vmem:[#allocation7 + $0x98] sm:$0xff]
    %v115 = vld [vmem:[#allocation7 + $0xa0] sm:$0xff]
    %v116 = vld [vmem:[#allocation7 + $0xa8] sm:$0xff]
    %v117 = vld [vmem:[#allocation7 + $0xb0] sm:$0xff]
    %v118 = vld [vmem:[#allocation7 + $0xb8] sm:$0xff]
    %v119 = vld [vmem:[#allocation7 + $0xc0] sm:$0xff]
    %v120 = vld [vmem:[#allocation7 + $0xc8] sm:$0xff]
    %v121 = vld [vmem:[#allocation7 + $0xd0] sm:$0xff]
    %v122 = vld [vmem:[#allocation7 + $0xd8] sm:$0xff]
    %v123 = vld [vmem:[#allocation7 + $0xe0] sm:$0xff]
    %v124 = vld [vmem:[#allocation7 + $0xe8] sm:$0xff]
    %v125 = vld [vmem:[#allocation7 + $0xf0] sm:$0xff]
    %v126 = vld [vmem:[#allocation7 + $0xf8] sm:$0xff]
    %v127 = vld [vmem:[#allocation7 + $0x100] sm:$0xff]
    %v128 = vld [vmem:[#allocation7 + $0x108] sm:$0xff]
    %v129 = vld [vmem:[#allocation7 + $0x110] sm:$0xff]
    %v130 = vld [vmem:[#allocation7 + $0x118] sm:$0xff]
    %v131 = vld [vmem:[#allocation7 + $0x120] sm:$0xff]
    %v132 = vld [vmem:[#allocation7 + $0x128] sm:$0xff]
    %v133 = vld [vmem:[#allocation7 + $0x130] sm:$0xff]
    %v134 = vld [vmem:[#allocation7 + $0x138] sm:$0xff]
    %v135 = vld [vmem:[#allocation7 + $0x140] sm:$0xff]
    %v136 = vld [vmem:[#allocation7 + $0x148] sm:$0xff]
    %v137 = vld [vmem:[#allocation7 + $0x150] sm:$0xff]
    %v138 = vld [vmem:[#allocation7 + $0x158] sm:$0xff]
    %v139 = vld [vmem:[#allocation7 + $0x160] sm:$0xff]
    %v140 = vld [vmem:[#allocation7 + $0x168] sm:$0xff]
    %v141 = vld [vmem:[#allocation7 + $0x170] sm:$0xff]
    %v142 = vld [vmem:[#allocation7 + $0x178] sm:$0xff]
    %v143 = vld [vmem:[#allocation7 + $0x180] sm:$0xff]
    %v144 = vld [vmem:[#allocation7 + $0x188] sm:$0xff]
    %v145 = vld [vmem:[#allocation7 + $0x190] sm:$0xff]
    %v146 = vld [vmem:[#allocation7 + $0x198] sm:$0xff]
    %v147 = vld [vmem:[#allocation7 + $0x1a0] sm:$0xff]
    %v148 = vld [vmem:[#allocation7 + $0x1a8] sm:$0xff]
    %v149 = vld [vmem:[#allocation7 + $0x1b0] sm:$0xff]
    %v150 = vld [vmem:[#allocation7 + $0x1b8] sm:$0xff]
    %v151 = vld [vmem:[#allocation7 + $0x1c0] sm:$0xff]
    %v152 = vld [vmem:[#allocation7 + $0x1c8] sm:$0xff]
    %v153 = vld [vmem:[#allocation7 + $0x1d0] sm:$0xff]
    %v154 = vld [vmem:[#allocation7 + $0x1d8] sm:$0xff]
    %v155 = vld [vmem:[#allocation7 + $0x1e0] sm:$0xff]
    %v156 = vld [vmem:[#allocation7 + $0x1e8] sm:$0xff]
    %v157 = vld [vmem:[#allocation7 + $0x1f0] sm:$0xff]
    %v158 = vld [vmem:[#allocation7 + $0x1f8] sm:$0xff]
    %v159 = vld [vmem:[#allocation7 + $0x200] sm:$0xff]
    %v160 = vld [vmem:[#allocation7 + $0x208] sm:$0xff]
    %v161 = vld [vmem:[#allocation7 + $0x210] sm:$0xff]
    %v162 = vld [vmem:[#allocation7 + $0x218] sm:$0xff]
    %v163 = vld [vmem:[#allocation7 + $0x220] sm:$0xff]
    %v164 = vld [vmem:[#allocation7 + $0x228] sm:$0xff]
    %v165 = vld [vmem:[#allocation7 + $0x230] sm:$0xff]
    %v166 = vld [vmem:[#allocation7 + $0x238] sm:$0xff]
    %v167 = vld [vmem:[#allocation7 + $0x240] sm:$0xff]
    %v168 = vld [vmem:[#allocation7 + $0x248] sm:$0xff]
    %v169 = vld [vmem:[#allocation7 + $0x250] sm:$0xff]
    %v170 = vld [vmem:[#allocation7 + $0x258] sm:$0xff]
    %v171 = vld [vmem:[#allocation7 + $0x260] sm:$0xff]
    %v172 = vld [vmem:[#allocation7 + $0x268] sm:$0xff]
    %v173 = vld [vmem:[#allocation7 + $0x270] sm:$0xff]
    %v174 = vld [vmem:[#allocation7 + $0x278] sm:$0xff]
    %v175 = vld [vmem:[#allocation7 + $0x280] sm:$0xff]
    %v176 = vld [vmem:[#allocation7 + $0x288] sm:$0xff]
    %v177 = vld [vmem:[#allocation7 + $0x290] sm:$0xff]
    %v178 = vld [vmem:[#allocation7 + $0x298] sm:$0xff]
    %v179 = vld [vmem:[#allocation7 + $0x2a0] sm:$0xff]
    %v180 = vld [vmem:[#allocation7 + $0x2a8] sm:$0xff]
    %v181 = vld [vmem:[#allocation7 + $0x2b0] sm:$0xff]
    %v182 = vld [vmem:[#allocation7 + $0x2b8] sm:$0xff]
    %v183 = vld [vmem:[#allocation7 + $0x2c0] sm:$0xff]
    %v184 = vld [vmem:[#allocation7 + $0x2c8] sm:$0xff]
    %v185 = vld [vmem:[#allocation7 + $0x2d0] sm:$0xff]
    %v186 = vld [vmem:[#allocation7 + $0x2d8] sm:$0xff]
    %v187 = vld [vmem:[#allocation7 + $0x2e0] sm:$0xff]
    %v188 = vld [vmem:[#allocation7 + $0x2e8] sm:$0xff]
    %v189 = vld [vmem:[#allocation7 + $0x2f0] sm:$0xff]
    %v190 = vld [vmem:[#allocation7 + $0x2f8] sm:$0xff]
    %v191 = vld [vmem:[#allocation7 + $0x300] sm:$0xff]
    %v192 = vld [vmem:[#allocation7 + $0x308] sm:$0xff]
    %v193 = vld [vmem:[#allocation7 + $0x310] sm:$0xff]
    %v194 = vld [vmem:[#allocation7 + $0x318] sm:$0xff]
    %v195 = vld [vmem:[#allocation7 + $0x320] sm:$0xff]
    %v196 = vld [vmem:[#allocation7 + $0x328] sm:$0xff]
    %v197 = vld [vmem:[#allocation7 + $0x330] sm:$0xff]
    %v198 = vld [vmem:[#allocation7 + $0x338] sm:$0xff]
    %v199 = vld [vmem:[#allocation7 + $0x340] sm:$0xff]
    %v200 = vld [vmem:[#allocation7 + $0x348] sm:$0xff]
    %v201 = vld [vmem:[#allocation7 + $0x350] sm:$0xff]
    %v202 = vld [vmem:[#allocation7 + $0x358] sm:$0xff]
    %v203 = vld [vmem:[#allocation7 + $0x360] sm:$0xff]
    %v204 = vld [vmem:[#allocation7 + $0x368] sm:$0xff]
    %v205 = vld [vmem:[#allocation7 + $0x370] sm:$0xff]
    %v206 = vld [vmem:[#allocation7 + $0x378] sm:$0xff]
    %v207 = vld [vmem:[#allocation7 + $0x380] sm:$0xff]
    %v208 = vld [vmem:[#allocation7 + $0x388] sm:$0xff]
    %v209 = vld [vmem:[#allocation7 + $0x390] sm:$0xff]
    %v210 = vld [vmem:[#allocation7 + $0x398] sm:$0xff]
    %v211 = vld [vmem:[#allocation7 + $0x3a0] sm:$0xff]
    %v212 = vld [vmem:[#allocation7 + $0x3a8] sm:$0xff]
    %v213 = vld [vmem:[#allocation7 + $0x3b0] sm:$0xff]
    %v214 = vld [vmem:[#allocation7 + $0x3b8] sm:$0xff]
    %v215 = vld [vmem:[#allocation7 + $0x3c0] sm:$0xff]
    %v216 = vld [vmem:[#allocation7 + $0x3c8] sm:$0xff]
    %v217 = vld [vmem:[#allocation7 + $0x3d0] sm:$0xff]
    %v218 = vld [vmem:[#allocation7 + $0x3d8] sm:$0xff]
    %v219 = vld [vmem:[#allocation7 + $0x3e0] sm:$0xff]
    %v220 = vld [vmem:[#allocation7 + $0x3e8] sm:$0xff]
    %v221 = vld [vmem:[#allocation7 + $0x3f0] sm:$0xff]
    %v222 = vld [vmem:[#allocation7 + $0x3f8] sm:$0xff]
    %v223 = vld [vmem:[%s3] sm:$0x1]
    %v225 = vperm.slane %v223, 0
    %227 = vmatpush.msra.mxu0 %v110
    %228 = vmatpush.msra.mxu0 %v109
    %229 = vmatpush.msra.mxu0 %v108
    %230 = vmatpush.msra.mxu0 %v107
    %231 = vmatpush.msra.mxu0 %v106
    %232 = vmatpush.msra.mxu0 %v105
    %233 = vmatpush.msra.mxu0 %v104
    %234 = vmatpush.msra.mxu0 %v103
    %235 = vmatpush.msra.mxu0 %v102
    %236 = vmatpush.msra.mxu0 %v101
    %237 = vmatpush.msra.mxu0 %v100
    %238 = vmatpush.msra.mxu0 %v99
    %239 = vmatpush.msra.mxu0 %v98
    %240 = vmatpush.msra.mxu0 %v97
    %241 = vmatpush.msra.mxu0 %v96
    %242 = vmatpush.msra.mxu0 %v95
    %243 = vmatmul.f32.gmra.mxu0 %v87
    %v244 = vpop.f32.mrf.mxu0
    %v245 = vadd.f32 %v225, %v244
    %246 = vdwg.mxu0
    %247 = vmatpush.msra.mxu0 %v126
    %248 = vmatpush.msra.mxu0 %v125
    %249 = vmatpush.msra.mxu0 %v124
    %250 = vmatpush.msra.mxu0 %v123
    %251 = vmatpush.msra.mxu0 %v122
    %252 = vmatpush.msra.mxu0 %v121
    %253 = vmatpush.msra.mxu0 %v120
    %254 = vmatpush.msra.mxu0 %v119
    %255 = vmatpush.msra.mxu0 %v118
    %256 = vmatpush.msra.mxu0 %v117
    %257 = vmatpush.msra.mxu0 %v116
    %258 = vmatpush.msra.mxu0 %v115
    %259 = vmatpush.msra.mxu0 %v114
    %260 = vmatpush.msra.mxu0 %v113
    %261 = vmatpush.msra.mxu0 %v112
    %262 = vmatpush.msra.mxu0 %v111
    %263 = vmatmul.f32.gmra.mxu0 %v88
    %v264 = vpop.f32.mrf.mxu0
    %v265 = vadd.f32 %v245, %v264
    %266 = vdwg.mxu0
    %267 = vmatpush.msra.mxu0 %v142
    %268 = vmatpush.msra.mxu0 %v141
    %269 = vmatpush.msra.mxu0 %v140
    %270 = vmatpush.msra.mxu0 %v139
    %271 = vmatpush.msra.mxu0 %v138
    %272 = vmatpush.msra.mxu0 %v137
    %273 = vmatpush.msra.mxu0 %v136
    %274 = vmatpush.msra.mxu0 %v135
    %275 = vmatpush.msra.mxu0 %v134
    %276 = vmatpush.msra.mxu0 %v133
    %277 = vmatpush.msra.mxu0 %v132
    %278 = vmatpush.msra.mxu0 %v131
    %279 = vmatpush.msra.mxu0 %v130
    %280 = vmatpush.msra.mxu0 %v129
    %281 = vmatpush.msra.mxu0 %v128
    %282 = vmatpush.msra.mxu0 %v127
    %283 = vmatmul.f32.gmra.mxu0 %v89
    %v284 = vpop.f32.mrf.mxu0
    %v285 = vadd.f32 %v265, %v284
    %286 = vdwg.mxu0
    %287 = vmatpush.msra.mxu0 %v158
    %288 = vmatpush.msra.mxu0 %v157
    %289 = vmatpush.msra.mxu0 %v156
    %290 = vmatpush.msra.mxu0 %v155
    %291 = vmatpush.msra.mxu0 %v154
    %292 = vmatpush.msra.mxu0 %v153
    %293 = vmatpush.msra.mxu0 %v152
    %294 = vmatpush.msra.mxu0 %v151
    %295 = vmatpush.msra.mxu0 %v150
    %296 = vmatpush.msra.mxu0 %v149
    %297 = vmatpush.msra.mxu0 %v148
    %298 = vmatpush.msra.mxu0 %v147
    %299 = vmatpush.msra.mxu0 %v146
    %300 = vmatpush.msra.mxu0 %v145
    %301 = vmatpush.msra.mxu0 %v144
    %302 = vmatpush.msra.mxu0 %v143
    %303 = vmatmul.f32.gmra.mxu0 %v90
    %v304 = vpop.f32.mrf.mxu0
    %v305 = vadd.f32 %v285, %v304
    %306 = vdwg.mxu0
    %307 = vmatpush.msra.mxu0 %v174
    %308 = vmatpush.msra.mxu0 %v173
    %309 = vmatpush.msra.mxu0 %v172
    %310 = vmatpush.msra.mxu0 %v171
    %311 = vmatpush.msra.mxu0 %v170
    %312 = vmatpush.msra.mxu0 %v169
    %313 = vmatpush.msra.mxu0 %v168
    %314 = vmatpush.msra.mxu0 %v167
    %315 = vmatpush.msra.mxu0 %v166
    %316 = vmatpush.msra.mxu0 %v165
    %317 = vmatpush.msra.mxu0 %v164
    %318 = vmatpush.msra.mxu0 %v163
    %319 = vmatpush.msra.mxu0 %v162
    %320 = vmatpush.msra.mxu0 %v161
    %321 = vmatpush.msra.mxu0 %v160
    %322 = vmatpush.msra.mxu0 %v159
    %323 = vmatmul.f32.gmra.mxu0 %v91
    %v324 = vpop.f32.mrf.mxu0
    %v325 = vadd.f32 %v305, %v324
    %326 = vdwg.mxu0
    %327 = vmatpush.msra.mxu0 %v190
    %328 = vmatpush.msra.mxu0 %v189
    %329 = vmatpush.msra.mxu0 %v188
    %330 = vmatpush.msra.mxu0 %v187
    %331 = vmatpush.msra.mxu0 %v186
    %332 = vmatpush.msra.mxu0 %v185
    %333 = vmatpush.msra.mxu0 %v184
    %334 = vmatpush.msra.mxu0 %v183
    %335 = vmatpush.msra.mxu0 %v182
    %336 = vmatpush.msra.mxu0 %v181
    %337 = vmatpush.msra.mxu0 %v180
    %338 = vmatpush.msra.mxu0 %v179
    %339 = vmatpush.msra.mxu0 %v178
    %340 = vmatpush.msra.mxu0 %v177
    %341 = vmatpush.msra.mxu0 %v176
    %342 = vmatpush.msra.mxu0 %v175
    %343 = vmatmul.f32.gmra.mxu0 %v92
    %v344 = vpop.f32.mrf.mxu0
    %v345 = vadd.f32 %v325, %v344
    %346 = vdwg.mxu0
    %347 = vmatpush.msra.mxu0 %v206
    %348 = vmatpush.msra.mxu0 %v205
    %349 = vmatpush.msra.mxu0 %v204
    %350 = vmatpush.msra.mxu0 %v203
    %351 = vmatpush.msra.mxu0 %v202
    %352 = vmatpush.msra.mxu0 %v201
    %353 = vmatpush.msra.mxu0 %v200
    %354 = vmatpush.msra.mxu0 %v199
    %355 = vmatpush.msra.mxu0 %v198
    %356 = vmatpush.msra.mxu0 %v197
    %357 = vmatpush.msra.mxu0 %v196
    %358 = vmatpush.msra.mxu0 %v195
    %359 = vmatpush.msra.mxu0 %v194
    %360 = vmatpush.msra.mxu0 %v193
    %361 = vmatpush.msra.mxu0 %v192
    %362 = vmatpush.msra.mxu0 %v191
    %363 = vmatmul.f32.gmra.mxu0 %v93
    %v364 = vpop.f32.mrf.mxu0
    %v365 = vadd.f32 %v345, %v364
    %366 = vdwg.mxu0
    %367 = vmatpush.msra.mxu0 %v222
    %368 = vmatpush.msra.mxu0 %v221
    %369 = vmatpush.msra.mxu0 %v220
    %370 = vmatpush.msra.mxu0 %v219
    %371 = vmatpush.msra.mxu0 %v218
    %372 = vmatpush.msra.mxu0 %v217
    %373 = vmatpush.msra.mxu0 %v216
    %374 = vmatpush.msra.mxu0 %v215
    %375 = vmatpush.msra.mxu0 %v214
    %376 = vmatpush.msra.mxu0 %v213
    %377 = vmatpush.msra.mxu0 %v212
    %378 = vmatpush.msra.mxu0 %v211
    %379 = vmatpush.msra.mxu0 %v210
    %380 = vmatpush.msra.mxu0 %v209
    %381 = vmatpush.msra.mxu0 %v208
    %382 = vmatpush.msra.mxu0 %v207
    %383 = vmatmul.f32.gmra.mxu0 %v94
    %v384 = vpop.f32.mrf.mxu0
    %v385 = vadd.f32 %v365, %v384
    %386 = vdwg.mxu0
    %387 = vst [vmem:[#allocation8] sm:$0xff] %v385
    // Predicated region
    $region30: #{tpu_custom_call.1} parent=1 // pred_check
      _
    $region31: #{tpu_custom_call.1} parent=1 // pred_check_branch
      %389 = sbr.rel (0) target = $region33
    $region32: #{tpu_custom_call.1} parent=1 // pred_region
      %391 = vsyncadd [#allocation4], 0
      %s393 = sshll.u32 [#allocation8], 4
      %s394 = int_to_ptr.vmem [resolvable:$true] %s393
      %s395 = sshll.u32 %s4, 4
      %s396 = int_to_ptr.hbm [resolvable:$true] %s395
      %398 = dma.vmem_to_hbm [thread:$0]  %s394, 128, %s396, [#allocation4]
    $region33: #{tpu_custom_call.1} parent=1 // pred_fallthru
      _
    // Predicated region
    $region34: #{tpu_custom_call.1} parent=1 // pred_check
      _
    $region35: #{tpu_custom_call.1} parent=1 // pred_check_branch
      %400 = sbr.rel (0) target = $region37
    $region36: #{tpu_custom_call.1} parent=1 // pred_region
      %402 = dma.done [#allocation4], 128
    $region37: #{tpu_custom_call.1} parent=1 // pred_fallthru
      _
    %403 = vsyncpa [#allocation3], 1
    %404 = vsyncpa [#allocation6], 1
    %405 = vsyncpa [#allocation4], 1

</llo_original>
